<compile_context>
chip_gen: v7x
topology: tpu7x:2x2x1
jax: 0.10.0
libtpu: 0.0.40
codegen_flags: <defaults>
</compile_context>

<pallas_src>
import jax
import jax.numpy as jnp
from jax import lax
from jax.experimental import pallas as pl
from jax.experimental.pallas import tpu as pltpu

# --- model hyperparameters (from the PyTorch script) --------------------------
HR_dim = 512
N = 5
bottleneck_dim = 64
LR_dim = 128
rank = 15

DEG_STRIDE = 16              # per-degree lane stride (rank=15 padded to 16 lanes)
PACK_LANES = 128             # N * DEG_STRIDE = 80 real lanes, padded to one vreg width
BIAS_LANE = rank             # spare lane inside degree-block 0 carries the folded bias
assert N * DEG_STRIDE <= PACK_LANES and rank < DEG_STRIDE


# --- fused kernel --------------------------------------------------------------
def _poly_w(u, lane):
    """CP degree product from the packed projection u (all f32 VPU/XLU work).

    Block 0 of u holds u_1, blocks 1..N-1 hold u_n -> use (1 + u_n); padded
    lanes/blocks have u == 0 exactly (zero A columns), so they become 0 / 1.
    """
    w = jnp.where(lane < DEG_STRIDE, u, u + 1.0)
    # Cyclic tree product over the eight 16-lane blocks (XLU rolls, ~free).
    # Afterwards every block holds x_N on its rank lanes, exact 0 on pad lanes.
    w = w * pltpu.roll(w, shift=4 * DEG_STRIDE, axis=1)
    w = w * pltpu.roll(w, shift=2 * DEG_STRIDE, axis=1)
    w = w * pltpu.roll(w, shift=DEG_STRIDE, axis=1)
    # Spare lane `rank` forced to 1: row `rank` of the next matrix is the bias.
    return jnp.where(lane == BIAS_LANE, 1.0, w)


def _autoencoder_kernel(x_ref, ea_ref, m_ref, dc_ref, o_ref):
    lane = lax.broadcasted_iota(jnp.int32, (x_ref.shape[0], PACK_LANES), 1)

    # ---- encoder: single packed MXU push for all N degree projections ----
    x = x_ref[...].astype(jnp.bfloat16)                       # bf16 MXU operand
    u_enc = jnp.dot(x, ea_ref[...], preferred_element_type=jnp.float32)
    w_enc = _poly_w(u_enc, lane)                               # f32 elementwise

    # ---- folded bottleneck: u_dec = w_enc @ (eC @ dA) (+ folded eb @ dA) ----
    u_dec = jnp.dot(w_enc.astype(jnp.bfloat16), m_ref[...],
                    preferred_element_type=jnp.float32)
    w_dec = _poly_w(u_dec, lane)

    # ---- decoder output projection (+ folded decoder bias row) ----
    y = jnp.dot(w_dec.astype(jnp.bfloat16), dc_ref[...],
                preferred_element_type=jnp.float32)
    o_ref[...] = y.astype(o_ref.dtype)                         # lane-dense 512-wide store


def _pick_tile_b(B):
    if B < 16:
        return B
    cap = min(512, B // 2)          # >=2 grid steps -> both v7x TensorCores get work
    for t in range(cap, 7, -1):
        if B % t == 0 and t % 8 == 0:
            return t
    return B


def autoencoder_forward(x, eA_packed, M_packed, dC_packed, *, tile_b=None):
    """Fused encoder+decoder forward on packed / folded bf16 parameters."""
    x = x.astype(jnp.float32)                    # reference forward does x.float()
    B = x.shape[0]
    d_in = eA_packed.shape[0]                    # 128
    d_out = dC_packed.shape[1]                   # 512

    if tile_b is None:
        tile_b = _pick_tile_b(B)
    assert B % tile_b == 0, "batch must be divisible by the batch tile"
    grid = (B // tile_b,)

    # Working set at tile_b<=512 is ~3 MiB, far below every generation's default
    # scoped VMEM, so no vmem_limit_bytes override is needed.
    return pl.pallas_call(
        _autoencoder_kernel,
        out_shape=jax.ShapeDtypeStruct((B, d_out), jnp.float32),
        grid_spec=pl.GridSpec(
            grid=grid,
            in_specs=[
                pl.BlockSpec((tile_b, d_in), lambda i: (i, 0)),            # x (batch-tiled)
                pl.BlockSpec((d_in, PACK_LANES), lambda i: (0, 0)),        # eA packed (bf16)
                pl.BlockSpec((PACK_LANES, PACK_LANES), lambda i: (0, 0)),  # M = eC@dA (bf16)
                pl.BlockSpec((PACK_LANES, d_out), lambda i: (0, 0)),       # dC packed (bf16)
            ],
            out_specs=pl.BlockSpec((tile_b, d_out), lambda i: (i, 0)),
        ),
        compiler_params=pltpu.CompilerParams(
            dimension_semantics=("parallel",),   # batch tiles shard across TCs (v7x)
        ),
    )(x, eA_packed, M_packed, dC_packed)


# --- deterministic parameter construction / packing -----------------------------
def init_generator_params(key, d_in, d_out, n_layers, cp_rank):
    ka, kc = jax.random.split(key)
    A = jax.random.normal(ka, (n_layers, d_in, cp_rank), jnp.float32)
    A = A / jnp.linalg.norm(A, axis=1, keepdims=True)      # 'normalize': True
    C = jax.random.normal(kc, (cp_rank, d_out), jnp.float32)
    C = C / jnp.linalg.norm(C, axis=0, keepdims=True)
    beta = jnp.zeros((1, d_out), jnp.float32)
    return A, C, beta


def _pack_A(A):
    n_layers, d_in, cp_rank = A.shape
    A_packed = jnp.zeros((d_in, PACK_LANES), jnp.float32)
    for n in range(n_layers):
        A_packed = A_packed.at[:, n * DEG_STRIDE:n * DEG_STRIDE + cp_rank].set(A[n])
    return A_packed


def _pack_C(C):
    cp_rank, d_out = C.shape
    return jnp.zeros((PACK_LANES, d_out), jnp.float32).at[:cp_rank, :].set(C)


def build_fused_params(enc_raw, dec_raw):
    """Pack, fold (eC@dA, biases into spare row `rank`) and quantize parameters."""
    eA, eC, eb = enc_raw
    dA, dC, db = dec_raw
    eA_p = _pack_A(eA)                                     # (128, 128)
    dA_p = _pack_A(dA)                                     # (64, 128)
    eC_p = _pack_C(eC)                                     # (128, 64); rows >= rank are 0
    dC_p = _pack_C(dC)                                     # (128, 512)

    # Fold encoder output projection (+ encoder bias) into the decoder input proj.
    M = jnp.dot(eC_p, dA_p, precision="highest")           # (128, 128); rows >= rank are 0
    M = M.at[BIAS_LANE, :].set(jnp.dot(eb, dA_p, precision="highest")[0])
    dC_p = dC_p.at[BIAS_LANE, :].set(db[0])                # folded decoder bias row

    f32_params = (eA_p, M, dC_p)
    bf16_params = tuple(p.astype(jnp.bfloat16) for p in f32_params)
    return bf16_params, f32_params


# --- pure-JAX references ---------------------------------------------------------
def fused_ref(x, eA_p, M_p, dC_p, *, operand_dtype, precision=None):
    """Mirror of the fused kernel math (same packing / fold / bias rows)."""
    lane = jnp.arange(PACK_LANES)

    def poly_w(u):
        w = jnp.where(lane < DEG_STRIDE, u, u + 1.0)
        prod = jnp.prod(w.reshape(-1, PACK_LANES // DEG_STRIDE, DEG_STRIDE), axis=1)
        w = jnp.tile(prod, (1, PACK_LANES // DEG_STRIDE))
        return jnp.where(lane == BIAS_LANE, 1.0, w)

    def dot(a, b):
        return jnp.dot(a.astype(operand_dtype), b.astype(operand_dtype),
                       preferred_element_type=jnp.float32, precision=precision)

    w_enc = poly_w(dot(x, eA_p))
    w_dec = poly_w(dot(w_enc, M_p))
    return dot(w_dec, dC_p)


def cp_generator_ref(z, A, C, b):
    """Original (unpacked, unfused) CP recurrence at full f32 precision."""
    x = jnp.dot(z, A[0], precision="highest")
    for n in range(1, A.shape[0]):
        x = jnp.dot(z, A[n], precision="highest") * x + x
    return jnp.dot(x, C, precision="highest") + b


if __name__ == "__main__":
    key = jax.random.PRNGKey(0)
    k_x, k_enc, k_dec = jax.random.split(key, 3)

    batch = 8
    x = jax.random.normal(k_x, (batch, LR_dim), jnp.float32)

    enc_raw = init_generator_params(k_enc, LR_dim, bottleneck_dim, N, rank)
    dec_raw = init_generator_params(k_dec, bottleneck_dim, HR_dim, N, rank)
    (eA_b, M_b, dC_b), (eA_f, M_f, dC_f) = build_fused_params(enc_raw, dec_raw)

    out = autoencoder_forward(x, eA_b, M_b, dC_b)
    out = jax.block_until_ready(out)
    assert out.shape == (batch, HR_dim), out.shape

    # 1) Kernel exactly implements the declared packed/folded bf16 math
    #    (tolerance only covers f32-reassociation -> rare bf16 rounding flips).
    ref_quant = fused_ref(x, eA_b, M_b, dC_b, operand_dtype=jnp.bfloat16)
    assert jnp.allclose(out, ref_quant, atol=2e-2, rtol=2e-2), "kernel vs bf16-aware ref"

    # 2) The packing + eC@dA fold + bias-row trick are algebraically equivalent to
    #    the original unfused CP recurrence (checked at f32; exact up to f32
    #    reassociation — the bf16 weight cast above is a deliberate perf choice).
    y_unfused = cp_generator_ref(cp_generator_ref(x, *enc_raw), *dec_raw)
    y_fused_f32 = fused_ref(x, eA_f, M_f, dC_f, operand_dtype=jnp.float32,
                            precision="highest")
    assert jnp.allclose(y_fused_f32, y_unfused, atol=5e-3, rtol=5e-3), "fold/pack algebra"

    print("KERNEL_OK")
</pallas_src>

<mosaic_0001>
module attributes {stable_mosaic.version = 11 : i64} {
  func.func @_autoencoder_kernel(%arg0: i32, %arg1: memref<8x128xf32, #tpu.memory_space<vmem>>, %arg2: memref<128x128xbf16, #tpu.memory_space<vmem>>, %arg3: memref<128x128xbf16, #tpu.memory_space<vmem>>, %arg4: memref<128x512xbf16, #tpu.memory_space<vmem>>, %arg5: memref<8x512xf32, #tpu.memory_space<vmem>>) attributes {dimension_semantics = [#tpu.dimension_semantics<parallel>], iteration_bounds = array<i64: 1>, scalar_prefetch = 0 : i64, scratch_operands = 0 : i64, tpu.core_type = #tpu.core_type<tc>, window_params = [{transform_indices = @transform_0, window_bounds = array<i64: 8, 128>}, {pipeline_mode = #tpu.pipeline_mode<synchronous>, transform_indices = @transform_1, window_bounds = array<i64: 128, 128>}, {pipeline_mode = #tpu.pipeline_mode<synchronous>, transform_indices = @transform_2, window_bounds = array<i64: 128, 128>}, {pipeline_mode = #tpu.pipeline_mode<synchronous>, transform_indices = @transform_3, window_bounds = array<i64: 128, 512>}, {transform_indices = @transform_4, window_bounds = array<i64: 8, 512>}]} {
    %0 = tpu.iota {dimensions = array<i32: 1>} : vector<8x128xi32>
    %c0 = arith.constant 0 : index
    %c0_0 = arith.constant 0 : index
    %1 = vector.load %arg1[%c0, %c0_0] : memref<8x128xf32, #tpu.memory_space<vmem>>, vector<8x128xf32>
    %2 = arith.truncf %1 : vector<8x128xf32> to vector<8x128xbf16>
    %c0_1 = arith.constant 0 : index
    %c0_2 = arith.constant 0 : index
    %3 = vector.load %arg2[%c0_1, %c0_2] : memref<128x128xbf16, #tpu.memory_space<vmem>>, vector<128x128xbf16>
    %cst = arith.constant dense<0.000000e+00> : vector<8x128xf32>
    %4 = tpu.matmul %2, %3, %cst {dimension_numbers = #tpu.dot_dimension_numbers<[1], [0], [0], [1], [0, 0, 1, 1], [], []>} : vector<8x128xbf16>, vector<128x128xbf16>, vector<8x128xf32> -> vector<8x128xf32>
    %c16_i32 = arith.constant 16 : i32
    %5 = vector.broadcast %c16_i32 : i32 to vector<8x128xi32>
    %6 = arith.cmpi slt, %0, %5 : vector<8x128xi32>
    %cst_3 = arith.constant 1.000000e+00 : f32
    %7 = vector.broadcast %cst_3 : f32 to vector<8x128xf32>
    %8 = arith.addf %4, %7 : vector<8x128xf32>
    %9 = arith.select %6, %4, %8 : vector<8x128xi1>, vector<8x128xf32>
    %c64_i32 = arith.constant 64 : i32
    %10 = tpu.dynamic_rotate %9 by %c64_i32 dim 1 : vector<8x128xf32>, i32 -> vector<8x128xf32>
    %11 = arith.mulf %9, %10 : vector<8x128xf32>
    %c32_i32 = arith.constant 32 : i32
    %12 = tpu.dynamic_rotate %11 by %c32_i32 dim 1 : vector<8x128xf32>, i32 -> vector<8x128xf32>
    %13 = arith.mulf %11, %12 : vector<8x128xf32>
    %c16_i32_4 = arith.constant 16 : i32
    %14 = tpu.dynamic_rotate %13 by %c16_i32_4 dim 1 : vector<8x128xf32>, i32 -> vector<8x128xf32>
    %15 = arith.mulf %13, %14 : vector<8x128xf32>
    %c15_i32 = arith.constant 15 : i32
    %16 = vector.broadcast %c15_i32 : i32 to vector<8x128xi32>
    %17 = arith.cmpi eq, %0, %16 : vector<8x128xi32>
    %cst_5 = arith.constant 1.000000e+00 : f32
    %18 = vector.broadcast %cst_5 : f32 to vector<8x128xf32>
    %19 = arith.select %17, %18, %15 : vector<8x128xi1>, vector<8x128xf32>
    %20 = arith.truncf %19 : vector<8x128xf32> to vector<8x128xbf16>
    %c0_6 = arith.constant 0 : index
    %c0_7 = arith.constant 0 : index
    %21 = vector.load %arg3[%c0_6, %c0_7] : memref<128x128xbf16, #tpu.memory_space<vmem>>, vector<128x128xbf16>
    %cst_8 = arith.constant dense<0.000000e+00> : vector<8x128xf32>
    %22 = tpu.matmul %20, %21, %cst_8 {dimension_numbers = #tpu.dot_dimension_numbers<[1], [0], [0], [1], [0, 0, 1, 1], [], []>} : vector<8x128xbf16>, vector<128x128xbf16>, vector<8x128xf32> -> vector<8x128xf32>
    %c16_i32_9 = arith.constant 16 : i32
    %23 = vector.broadcast %c16_i32_9 : i32 to vector<8x128xi32>
    %24 = arith.cmpi slt, %0, %23 : vector<8x128xi32>
    %cst_10 = arith.constant 1.000000e+00 : f32
    %25 = vector.broadcast %cst_10 : f32 to vector<8x128xf32>
    %26 = arith.addf %22, %25 : vector<8x128xf32>
    %27 = arith.select %24, %22, %26 : vector<8x128xi1>, vector<8x128xf32>
    %c64_i32_11 = arith.constant 64 : i32
    %28 = tpu.dynamic_rotate %27 by %c64_i32_11 dim 1 : vector<8x128xf32>, i32 -> vector<8x128xf32>
    %29 = arith.mulf %27, %28 : vector<8x128xf32>
    %c32_i32_12 = arith.constant 32 : i32
    %30 = tpu.dynamic_rotate %29 by %c32_i32_12 dim 1 : vector<8x128xf32>, i32 -> vector<8x128xf32>
    %31 = arith.mulf %29, %30 : vector<8x128xf32>
    %c16_i32_13 = arith.constant 16 : i32
    %32 = tpu.dynamic_rotate %31 by %c16_i32_13 dim 1 : vector<8x128xf32>, i32 -> vector<8x128xf32>
    %33 = arith.mulf %31, %32 : vector<8x128xf32>
    %c15_i32_14 = arith.constant 15 : i32
    %34 = vector.broadcast %c15_i32_14 : i32 to vector<8x128xi32>
    %35 = arith.cmpi eq, %0, %34 : vector<8x128xi32>
    %cst_15 = arith.constant 1.000000e+00 : f32
    %36 = vector.broadcast %cst_15 : f32 to vector<8x128xf32>
    %37 = arith.select %35, %36, %33 : vector<8x128xi1>, vector<8x128xf32>
    %38 = arith.truncf %37 : vector<8x128xf32> to vector<8x128xbf16>
    %c0_16 = arith.constant 0 : index
    %c0_17 = arith.constant 0 : index
    %39 = vector.load %arg4[%c0_16, %c0_17] : memref<128x512xbf16, #tpu.memory_space<vmem>>, vector<128x512xbf16>
    %cst_18 = arith.constant dense<0.000000e+00> : vector<8x512xf32>
    %40 = tpu.matmul %38, %39, %cst_18 {dimension_numbers = #tpu.dot_dimension_numbers<[1], [0], [0], [1], [0, 0, 1, 1], [], []>} : vector<8x128xbf16>, vector<128x512xbf16>, vector<8x512xf32> -> vector<8x512xf32>
    %c0_19 = arith.constant 0 : index
    %c0_20 = arith.constant 0 : index
    %41 = vector.load %arg5[%c0_19, %c0_20] : memref<8x512xf32, #tpu.memory_space<vmem>>, vector<8x512xf32>
    tpu.vector_store %arg5[%c0_19, %c0_20], %40 {strides = array<i32>} : memref<8x512xf32, #tpu.memory_space<vmem>>, vector<8x512xf32>,
    return
  }
  func.func @transform_0(%arg0: i32) -> (i32, i32) {
    %c0_i32 = arith.constant 0 : i32
    %c0_i32_0 = arith.constant 0 : i32
    return %arg0, %c0_i32 : i32, i32
  }
  func.func @transform_1(%arg0: i32) -> (i32, i32) {
    %c0_i32 = arith.constant 0 : i32
    %c0_i32_0 = arith.constant 0 : i32
    %c0_i32_1 = arith.constant 0 : i32
    return %c0_i32, %c0_i32_0 : i32, i32
  }
  func.func @transform_2(%arg0: i32) -> (i32, i32) {
    %c0_i32 = arith.constant 0 : i32
    %c0_i32_0 = arith.constant 0 : i32
    %c0_i32_1 = arith.constant 0 : i32
    return %c0_i32, %c0_i32_0 : i32, i32
  }
  func.func @transform_3(%arg0: i32) -> (i32, i32) {
    %c0_i32 = arith.constant 0 : i32
    %c0_i32_0 = arith.constant 0 : i32
    %c0_i32_1 = arith.constant 0 : i32
    return %c0_i32, %c0_i32_0 : i32, i32
  }
  func.func @transform_4(%arg0: i32) -> (i32, i32) {
    %c0_i32 = arith.constant 0 : i32
    %c0_i32_0 = arith.constant 0 : i32
    return %arg0, %c0_i32 : i32, i32
  }
}

</mosaic_0001>

<llo_original>
// kernel: tpu_custom_call.1
$region0: #{tpu_custom_call.1}
  #allocation0 [shape = 'u32[]', space=smem, size = 0x4, offset = 0x4, fixed_abs, tag = 'smem constant byte address 0x4 - core index']
  #allocation1 [shape = 'u32[144,128]{1,0:T(1,128)}', space=vmem, size = 0x12000, scoped, tag = 'internal scratch']
  %s0 = inlined_call_operand.hbm [shape: f32[8,128], index: 0, kind: input, shape index: {}]
  %s1 = inlined_call_operand.hbm [shape: bf16[128,128], index: 1, kind: input, shape index: {}]
  %s2 = inlined_call_operand.hbm [shape: bf16[128,128], index: 2, kind: input, shape index: {}]
  %s3 = inlined_call_operand.hbm [shape: bf16[128,512], index: 3, kind: input, shape index: {}]
  %s4 = inlined_call_operand.hbm [shape: f32[8,512], index: 4, kind: output, shape index: {}]
  %s5 = sld [smem:[#allocation0]]
  $region42: #{tpu_custom_call.1} parent=0
    _
  %s7 = ssub.s32 1, %s5
  %s8 = scalar_select 0, %s7, %s5
  $region1: #{tpu_custom_call.1} parent=0
    #allocation2 [shape = 'u8[4096]{0}', space=vmem, size = 0x1000, scoped, tag = 'input window, operand 0, single buffered']
    #allocation3 [shape = 's32[1]{0}', space=sflag, size = 0x4, scoped, tag = 'scoped memory for tpu_custom_call.1']
    #allocation4 [shape = 's32[1]{0}', space=sflag, size = 0x4, scoped, tag = 'scoped memory for tpu_custom_call.1']
    #allocation5 [shape = 'u8[32768]{0}', space=vmem, size = 0x8000, scoped, tag = 'input window, operand 1, single buffered']
    #allocation6 [shape = 's32[1]{0}', space=sflag, size = 0x4, scoped, tag = 'scoped memory for tpu_custom_call.1']
    #allocation7 [shape = 'u8[32768]{0}', space=vmem, size = 0x8000, scoped, tag = 'input window, operand 2, single buffered']
    #allocation8 [shape = 'u8[131072]{0}', space=vmem, size = 0x20000, scoped, tag = 'input window, operand 3, single buffered']
    #allocation9 [shape = 's32[1]{0}', space=sflag, size = 0x4, scoped, tag = 'scoped memory for tpu_custom_call.1']
    #allocation10 [shape = 'u8[16384]{0}', space=vmem, size = 0x4000, scoped, tag = 'output window, operand 0, single buffered']
    %9 = vsyncpa [#allocation3], 0
    %10 = vsyncpa [#allocation6], 0
    %11 = vsyncpa [#allocation9], 0
    %12 = vsyncpa [#allocation4], 0
    // Predicated region
    $region2: #{tpu_custom_call.1} parent=1 // pred_check
      _
    $region3: #{tpu_custom_call.1} parent=1 // pred_check_branch
      %14 = sbr.rel (0) target = $region5
    $region4: #{tpu_custom_call.1} parent=1 // pred_region
      %s16 = ssub.s32 128, 128
      %17 = vsyncadd [#allocation3], %s16
      %s19 = sshll.u32 [#allocation2], 4
      %s20 = int_to_ptr.vmem [resolvable:$true] %s19
      %22 = dma.hbm_to_vmem [thread:$0]  %s0, 128, %s20, [#allocation3]
    $region5: #{tpu_custom_call.1} parent=1 // pred_fallthru
      _
    // Predicated region
    $region6: #{tpu_custom_call.1} parent=1 // pred_check
      _
    $region7: #{tpu_custom_call.1} parent=1 // pred_check_branch
      %24 = sbr.rel (0) target = $region9
    $region8: #{tpu_custom_call.1} parent=1 // pred_region
      %s26 = ssub.s32 1024, 1024
      %27 = vsyncadd [#allocation6], %s26
      %s28 = sshll.u32 [#allocation5], 4
      %s29 = int_to_ptr.vmem [resolvable:$true] %s28
      %34 = dma.hbm_to_vmem [thread:$0]  %s1, 1024, %s29, [#allocation6], 64, 64, 4
    $region9: #{tpu_custom_call.1} parent=1 // pred_fallthru
      _
    // Predicated region
    $region10: #{tpu_custom_call.1} parent=1 // pred_check
      _
    $region11: #{tpu_custom_call.1} parent=1 // pred_check_branch
      %36 = sbr.rel (0) target = $region13
    $region12: #{tpu_custom_call.1} parent=1 // pred_region
      %s38 = ssub.s32 1024, 1024
      %39 = vsyncadd [#allocation6], %s38
      %s40 = sshll.u32 [#allocation7], 4
      %s41 = int_to_ptr.vmem [resolvable:$true] %s40
      %46 = dma.hbm_to_vmem [thread:$0]  %s2, 1024, %s41, [#allocation6], 64, 64, 4
    $region13: #{tpu_custom_call.1} parent=1 // pred_fallthru
      _
    // Predicated region
    $region14: #{tpu_custom_call.1} parent=1 // pred_check
      _
    $region15: #{tpu_custom_call.1} parent=1 // pred_check_branch
      %48 = sbr.rel (0) target = $region17
    $region16: #{tpu_custom_call.1} parent=1 // pred_region
      %s50 = ssub.s32 4096, 4096
      %51 = vsyncadd [#allocation9], %s50
      %s52 = sshll.u32 [#allocation8], 4
      %s53 = int_to_ptr.vmem [resolvable:$true] %s52
      %58 = dma.hbm_to_vmem [thread:$0]  %s3, 4096, %s53, [#allocation9], 256, 256, 16
    $region17: #{tpu_custom_call.1} parent=1 // pred_fallthru
      _
    // Predicated region
    $region18: #{tpu_custom_call.1} parent=1 // pred_check
      _
    $region19: #{tpu_custom_call.1} parent=1 // pred_check_branch
      %60 = sbr.rel (0) target = $region21
    $region20: #{tpu_custom_call.1} parent=1 // pred_region
      %61 = dma.done [#allocation3], 128
    $region21: #{tpu_custom_call.1} parent=1 // pred_fallthru
      _
    // Predicated region
    $region22: #{tpu_custom_call.1} parent=1 // pred_check
      _
    $region23: #{tpu_custom_call.1} parent=1 // pred_check_branch
      %63 = sbr.rel (0) target = $region25
    $region24: #{tpu_custom_call.1} parent=1 // pred_region
      %64 = dma.done [#allocation6], 1024
    $region25: #{tpu_custom_call.1} parent=1 // pred_fallthru
      _
    // Predicated region
    $region26: #{tpu_custom_call.1} parent=1 // pred_check
      _
    $region27: #{tpu_custom_call.1} parent=1 // pred_check_branch
      %66 = sbr.rel (0) target = $region29
    $region28: #{tpu_custom_call.1} parent=1 // pred_region
      %67 = dma.done [#allocation6], 1024
    $region29: #{tpu_custom_call.1} parent=1 // pred_fallthru
      _
    // Predicated region
    $region30: #{tpu_custom_call.1} parent=1 // pred_check
      _
    $region31: #{tpu_custom_call.1} parent=1 // pred_check_branch
      %69 = sbr.rel (0) target = $region33
    $region32: #{tpu_custom_call.1} parent=1 // pred_region
      %70 = dma.done [#allocation9], 4096
    $region33: #{tpu_custom_call.1} parent=1 // pred_fallthru
      _
    %v72 = vlaneseq
    %v73 = vand.u32 %v72, 127
    %v74 = vld [vmem:[#allocation2] sm:$0xff]
    %v75 = vpack.c.bf16 %v74, %v74
    %v76 = vld [vmem:[#allocation5] sm:$0xf]
    %v77 = vld [vmem:[#allocation5 + $0x4] sm:$0xf]
    %v78 = vld [vmem:[#allocation5 + $0x8] sm:$0xf]
    %v79 = vld [vmem:[#allocation5 + $0xc] sm:$0xf]
    %v80 = vld [vmem:[#allocation5 + $0x10] sm:$0xf]
    %v81 = vld [vmem:[#allocation5 + $0x14] sm:$0xf]
    %v82 = vld [vmem:[#allocation5 + $0x18] sm:$0xf]
    %v83 = vld [vmem:[#allocation5 + $0x1c] sm:$0xf]
    %v84 = vld [vmem:[#allocation5 + $0x20] sm:$0xf]
    %v85 = vld [vmem:[#allocation5 + $0x24] sm:$0xf]
    %v86 = vld [vmem:[#allocation5 + $0x28] sm:$0xf]
    %v87 = vld [vmem:[#allocation5 + $0x2c] sm:$0xf]
    %v88 = vld [vmem:[#allocation5 + $0x30] sm:$0xf]
    %v89 = vld [vmem:[#allocation5 + $0x34] sm:$0xf]
    %v90 = vld [vmem:[#allocation5 + $0x38] sm:$0xf]
    %v91 = vld [vmem:[#allocation5 + $0x3c] sm:$0xf]
    %v108 = vunpack.c.l.b16 %v76
    %v109 = vunpack.c.l.b16 %v77
    %v110 = vunpack.c.l.b16 %v78
    %v111 = vunpack.c.l.b16 %v79
    %v112 = vunpack.c.l.b16 %v80
    %v113 = vunpack.c.l.b16 %v81
    %v114 = vunpack.c.l.b16 %v82
    %v115 = vunpack.c.l.b16 %v83
    %v116 = vunpack.c.l.b16 %v84
    %v117 = vunpack.c.l.b16 %v85
    %v118 = vunpack.c.l.b16 %v86
    %v119 = vunpack.c.l.b16 %v87
    %v120 = vunpack.c.l.b16 %v88
    %v121 = vunpack.c.l.b16 %v89
    %v122 = vunpack.c.l.b16 %v90
    %v123 = vunpack.c.l.b16 %v91
    %v124 = vpack.c.b16 %v109, %v108
    %v125 = vpack.c.b16 %v111, %v110
    %v126 = vpack.c.b16 %v113, %v112
    %v127 = vpack.c.b16 %v115, %v114
    %v128 = vpack.c.b16 %v117, %v116
    %v129 = vpack.c.b16 %v119, %v118
    %v130 = vpack.c.b16 %v121, %v120
    %v131 = vpack.c.b16 %v123, %v122
    %140 = vmatprep.subr.bf16.mxu0 0
    %141 = vmatpush1.bf16.msra.mxu0 %v124
    %142 = vmatprep.subr.bf16.mxu0 0
    %143 = vmatpush1.bf16.msra.mxu0 %v125
    %144 = vmatprep.subr.bf16.mxu0 0
    %145 = vmatpush1.bf16.msra.mxu0 %v126
    %146 = vmatprep.subr.bf16.mxu0 0
    %147 = vmatpush1.bf16.msra.mxu0 %v127
    %148 = vmatprep.subr.bf16.mxu0 0
    %149 = vmatpush1.bf16.msra.mxu0 %v128
    %150 = vmatprep.subr.bf16.mxu0 0
    %151 = vmatpush1.bf16.msra.mxu0 %v129
    %152 = vmatprep.subr.bf16.mxu0 0
    %153 = vmatpush1.bf16.msra.mxu0 %v130
    %154 = vmatprep.subr.bf16.mxu0 0
    %155 = vmatpush1.bf16.msra.mxu0 %v131
    %156 = vmatprep.subr.bf16.mxu0 0
    %157 = vmatpush1.bf16.msra.mxu0 0
    %158 = vmatprep.subr.bf16.mxu0 0
    %159 = vmatpush1.bf16.msra.mxu0 0
    %160 = vmatprep.subr.bf16.mxu0 0
    %161 = vmatpush1.bf16.msra.mxu0 0
    %162 = vmatprep.subr.bf16.mxu0 0
    %163 = vmatpush1.bf16.msra.mxu0 0
    %164 = vmatprep.subr.bf16.mxu0 0
    %165 = vmatpush1.bf16.msra.mxu0 0
    %166 = vmatprep.subr.bf16.mxu0 0
    %167 = vmatpush1.bf16.msra.mxu0 0
    %168 = vmatprep.subr.bf16.mxu0 0
    %169 = vmatpush1.bf16.msra.mxu0 0
    %170 = vmatprep.subr.bf16.mxu0 0
    %171 = vmatpush1.bf16.msra.mxu0 0
    %172 = vmatprep.mubr.bf16.mxu0 0
    %173 = vmatmul.mubr.bf16.gmra.mrb[0].mxu0 %v75
    %v174 = vpop.f32.mrb[0].mxu0
    %v175 = vadd.f32 0.0, %v174
    %v176 = vpop.f32.mrb[0].mxu0
    %v177 = vpop.f32.mrb[0].mxu0
    %v178 = vpop.f32.mrb[0].mxu0
    %179 = vdwg.mxu0
    %vm180 = vcmp.lt.s32.totalorder %v73, 16
    %v181 = vadd.f32 %v175, 1.0
    %v182 = vsel %vm180, %v175, %v181
    %183 = vrot.lane.b32.xlu0 %v182, 64
    %v184 = vpop.permute.xlu0 %183
    %v185 = vmul.f32 %v182, %v184
    %186 = vrot.lane.b32.xlu0 %v185, 32
    %v187 = vpop.permute.xlu0 %186
    %v188 = vmul.f32 %v185, %v187
    %189 = vrot.lane.b32.xlu0 %v188, 16
    %v190 = vpop.permute.xlu0 %189
    %v191 = vmul.f32 %v188, %v190
    %vm192 = vcmp.eq.s32.totalorder %v73, 15
    %v193 = vsel %vm192, 1.0, %v191
    %v194 = vpack.c.bf16 %v193, %v193
    %v195 = vld [vmem:[#allocation7] sm:$0xf]
    %v196 = vld [vmem:[#allocation7 + $0x4] sm:$0xf]
    %v197 = vld [vmem:[#allocation7 + $0x8] sm:$0xf]
    %v198 = vld [vmem:[#allocation7 + $0xc] sm:$0xf]
    %v199 = vld [vmem:[#allocation7 + $0x10] sm:$0xf]
    %v200 = vld [vmem:[#allocation7 + $0x14] sm:$0xf]
    %v201 = vld [vmem:[#allocation7 + $0x18] sm:$0xf]
    %v202 = vld [vmem:[#allocation7 + $0x1c] sm:$0xf]
    %v203 = vld [vmem:[#allocation7 + $0x20] sm:$0xf]
    %v204 = vld [vmem:[#allocation7 + $0x24] sm:$0xf]
    %v205 = vld [vmem:[#allocation7 + $0x28] sm:$0xf]
    %v206 = vld [vmem:[#allocation7 + $0x2c] sm:$0xf]
    %v207 = vld [vmem:[#allocation7 + $0x30] sm:$0xf]
    %v208 = vld [vmem:[#allocation7 + $0x34] sm:$0xf]
    %v209 = vld [vmem:[#allocation7 + $0x38] sm:$0xf]
    %v210 = vld [vmem:[#allocation7 + $0x3c] sm:$0xf]
    %v227 = vunpack.c.l.b16 %v195
    %v228 = vunpack.c.l.b16 %v196
    %v229 = vunpack.c.l.b16 %v197
    %v230 = vunpack.c.l.b16 %v198
    %v231 = vunpack.c.l.b16 %v199
    %v232 = vunpack.c.l.b16 %v200
    %v233 = vunpack.c.l.b16 %v201
    %v234 = vunpack.c.l.b16 %v202
    %v235 = vunpack.c.l.b16 %v203
    %v236 = vunpack.c.l.b16 %v204
    %v237 = vunpack.c.l.b16 %v205
    %v238 = vunpack.c.l.b16 %v206
    %v239 = vunpack.c.l.b16 %v207
    %v240 = vunpack.c.l.b16 %v208
    %v241 = vunpack.c.l.b16 %v209
    %v242 = vunpack.c.l.b16 %v210
    %v243 = vpack.c.b16 %v228, %v227
    %v244 = vpack.c.b16 %v230, %v229
    %v245 = vpack.c.b16 %v232, %v231
    %v246 = vpack.c.b16 %v234, %v233
    %v247 = vpack.c.b16 %v236, %v235
    %v248 = vpack.c.b16 %v238, %v237
    %v249 = vpack.c.b16 %v240, %v239
    %v250 = vpack.c.b16 %v242, %v241
    %259 = vmatprep.subr.bf16.mxu0 0
    %260 = vmatpush1.bf16.msra.mxu0 %v243
    %261 = vmatprep.subr.bf16.mxu0 0
    %262 = vmatpush1.bf16.msra.mxu0 %v244
    %263 = vmatprep.subr.bf16.mxu0 0
    %264 = vmatpush1.bf16.msra.mxu0 %v245
    %265 = vmatprep.subr.bf16.mxu0 0
    %266 = vmatpush1.bf16.msra.mxu0 %v246
    %267 = vmatprep.subr.bf16.mxu0 0
    %268 = vmatpush1.bf16.msra.mxu0 %v247
    %269 = vmatprep.subr.bf16.mxu0 0
    %270 = vmatpush1.bf16.msra.mxu0 %v248
    %271 = vmatprep.subr.bf16.mxu0 0
    %272 = vmatpush1.bf16.msra.mxu0 %v249
    %273 = vmatprep.subr.bf16.mxu0 0
    %274 = vmatpush1.bf16.msra.mxu0 %v250
    %275 = vmatprep.subr.bf16.mxu0 0
    %276 = vmatpush1.bf16.msra.mxu0 0
    %277 = vmatprep.subr.bf16.mxu0 0
    %278 = vmatpush1.bf16.msra.mxu0 0
    %279 = vmatprep.subr.bf16.mxu0 0
    %280 = vmatpush1.bf16.msra.mxu0 0
    %281 = vmatprep.subr.bf16.mxu0 0
    %282 = vmatpush1.bf16.msra.mxu0 0
    %283 = vmatprep.subr.bf16.mxu0 0
    %284 = vmatpush1.bf16.msra.mxu0 0
    %285 = vmatprep.subr.bf16.mxu0 0
    %286 = vmatpush1.bf16.msra.mxu0 0
    %287 = vmatprep.subr.bf16.mxu0 0
    %288 = vmatpush1.bf16.msra.mxu0 0
    %289 = vmatprep.subr.bf16.mxu0 0
    %290 = vmatpush1.bf16.msra.mxu0 0
    %291 = vmatprep.mubr.bf16.mxu0 0
    %292 = vmatmul.mubr.bf16.gmra.mrb[0].mxu0 %v194
    %v293 = vpop.f32.mrb[0].mxu0
    %v294 = vadd.f32 0.0, %v293
    %v295 = vpop.f32.mrb[0].mxu0
    %v296 = vpop.f32.mrb[0].mxu0
    %v297 = vpop.f32.mrb[0].mxu0
    %298 = vdwg.mxu0
    %v299 = vadd.f32 %v294, 1.0
    %v300 = vsel %vm180, %v294, %v299
    %301 = vrot.lane.b32.xlu0 %v300, 64
    %v302 = vpop.permute.xlu0 %301
    %v303 = vmul.f32 %v300, %v302
    %304 = vrot.lane.b32.xlu0 %v303, 32
    %v305 = vpop.permute.xlu0 %304
    %v306 = vmul.f32 %v303, %v305
    %307 = vrot.lane.b32.xlu0 %v306, 16
    %v308 = vpop.permute.xlu0 %307
    %v309 = vmul.f32 %v306, %v308
    %v310 = vsel %vm192, 1.0, %v309
    %v311 = vpack.c.bf16 %v310, %v310
    %v312 = vld [vmem:[#allocation8] sm:$0xff]
    %v313 = vld [vmem:[#allocation8 + $0x8] sm:$0xff]
    %v314 = vld [vmem:[#allocation8 + $0x10] sm:$0xff]
    %v315 = vld [vmem:[#allocation8 + $0x18] sm:$0xff]
    %v316 = vld [vmem:[#allocation8 + $0x20] sm:$0xff]
    %v317 = vld [vmem:[#allocation8 + $0x28] sm:$0xff]
    %v318 = vld [vmem:[#allocation8 + $0x30] sm:$0xff]
    %v319 = vld [vmem:[#allocation8 + $0x38] sm:$0xff]
    %v320 = vld [vmem:[#allocation8 + $0x40] sm:$0xff]
    %v321 = vld [vmem:[#allocation8 + $0x48] sm:$0xff]
    %v322 = vld [vmem:[#allocation8 + $0x50] sm:$0xff]
    %v323 = vld [vmem:[#allocation8 + $0x58] sm:$0xff]
    %v324 = vld [vmem:[#allocation8 + $0x60] sm:$0xff]
    %v325 = vld [vmem:[#allocation8 + $0x68] sm:$0xff]
    %v326 = vld [vmem:[#allocation8 + $0x70] sm:$0xff]
    %v327 = vld [vmem:[#allocation8 + $0x78] sm:$0xff]
    %v328 = vld [vmem:[#allocation8 + $0x80] sm:$0xff]
    %v329 = vld [vmem:[#allocation8 + $0x88] sm:$0xff]
    %v330 = vld [vmem:[#allocation8 + $0x90] sm:$0xff]
    %v331 = vld [vmem:[#allocation8 + $0x98] sm:$0xff]
    %v332 = vld [vmem:[#allocation8 + $0xa0] sm:$0xff]
    %v333 = vld [vmem:[#allocation8 + $0xa8] sm:$0xff]
    %v334 = vld [vmem:[#allocation8 + $0xb0] sm:$0xff]
    %v335 = vld [vmem:[#allocation8 + $0xb8] sm:$0xff]
    %v336 = vld [vmem:[#allocation8 + $0xc0] sm:$0xff]
    %v337 = vld [vmem:[#allocation8 + $0xc8] sm:$0xff]
    %v338 = vld [vmem:[#allocation8 + $0xd0] sm:$0xff]
    %v339 = vld [vmem:[#allocation8 + $0xd8] sm:$0xff]
    %v340 = vld [vmem:[#allocation8 + $0xe0] sm:$0xff]
    %v341 = vld [vmem:[#allocation8 + $0xe8] sm:$0xff]
    %v342 = vld [vmem:[#allocation8 + $0xf0] sm:$0xff]
    %v343 = vld [vmem:[#allocation8 + $0xf8] sm:$0xff]
    %v376 = vunpack.c.l.b16 %v312
    %v377 = vunpack.c.h.b16 %v312
    %v378 = vunpack.c.l.b16 %v313
    %v379 = vunpack.c.h.b16 %v313
    %v380 = vunpack.c.l.b16 %v314
    %v381 = vunpack.c.h.b16 %v314
    %v382 = vunpack.c.l.b16 %v315
    %v383 = vunpack.c.h.b16 %v315
    %v384 = vunpack.c.l.b16 %v316
    %v385 = vunpack.c.h.b16 %v316
    %v386 = vunpack.c.l.b16 %v317
    %v387 = vunpack.c.h.b16 %v317
    %v388 = vunpack.c.l.b16 %v318
    %v389 = vunpack.c.h.b16 %v318
    %v390 = vunpack.c.l.b16 %v319
    %v391 = vunpack.c.h.b16 %v319
    %v392 = vunpack.c.l.b16 %v320
    %v393 = vunpack.c.h.b16 %v320
    %v394 = vunpack.c.l.b16 %v321
    %v395 = vunpack.c.h.b16 %v321
    %v396 = vunpack.c.l.b16 %v322
    %v397 = vunpack.c.h.b16 %v322
    %v398 = vunpack.c.l.b16 %v323
    %v399 = vunpack.c.h.b16 %v323
    %v400 = vunpack.c.l.b16 %v324
    %v401 = vunpack.c.h.b16 %v324
    %v402 = vunpack.c.l.b16 %v325
    %v403 = vunpack.c.h.b16 %v325
    %v404 = vunpack.c.l.b16 %v326
    %v405 = vunpack.c.h.b16 %v326
    %v406 = vunpack.c.l.b16 %v327
    %v407 = vunpack.c.h.b16 %v327
    %v408 = vunpack.c.l.b16 %v328
    %v409 = vunpack.c.h.b16 %v328
    %v410 = vunpack.c.l.b16 %v329
    %v411 = vunpack.c.h.b16 %v329
    %v412 = vunpack.c.l.b16 %v330
    %v413 = vunpack.c.h.b16 %v330
    %v414 = vunpack.c.l.b16 %v331
    %v415 = vunpack.c.h.b16 %v331
    %v416 = vunpack.c.l.b16 %v332
    %v417 = vunpack.c.h.b16 %v332
    %v418 = vunpack.c.l.b16 %v333
    %v419 = vunpack.c.h.b16 %v333
    %v420 = vunpack.c.l.b16 %v334
    %v421 = vunpack.c.h.b16 %v334
    %v422 = vunpack.c.l.b16 %v335
    %v423 = vunpack.c.h.b16 %v335
    %v424 = vunpack.c.l.b16 %v336
    %v425 = vunpack.c.h.b16 %v336
    %v426 = vunpack.c.l.b16 %v337
    %v427 = vunpack.c.h.b16 %v337
    %v428 = vunpack.c.l.b16 %v338
    %v429 = vunpack.c.h.b16 %v338
    %v430 = vunpack.c.l.b16 %v339
    %v431 = vunpack.c.h.b16 %v339
    %v432 = vunpack.c.l.b16 %v340
    %v433 = vunpack.c.h.b16 %v340
    %v434 = vunpack.c.l.b16 %v341
    %v435 = vunpack.c.h.b16 %v341
    %v436 = vunpack.c.l.b16 %v342
    %v437 = vunpack.c.h.b16 %v342
    %v438 = vunpack.c.l.b16 %v343
    %v439 = vunpack.c.h.b16 %v343
    %v440 = vpack.c.b16 %v380, %v376
    %v441 = vpack.c.b16 %v381, %v377
    %v442 = vpack.c.b16 %v382, %v378
    %v443 = vpack.c.b16 %v383, %v379
    %v444 = vpack.c.b16 %v388, %v384
    %v445 = vpack.c.b16 %v389, %v385
    %v446 = vpack.c.b16 %v390, %v386
    %v447 = vpack.c.b16 %v391, %v387
    %v448 = vpack.c.b16 %v396, %v392
    %v449 = vpack.c.b16 %v397, %v393
    %v450 = vpack.c.b16 %v398, %v394
    %v451 = vpack.c.b16 %v399, %v395
    %v452 = vpack.c.b16 %v404, %v400
    %v453 = vpack.c.b16 %v405, %v401
    %v454 = vpack.c.b16 %v406, %v402
    %v455 = vpack.c.b16 %v407, %v403
    %v456 = vpack.c.b16 %v412, %v408
    %v457 = vpack.c.b16 %v413, %v409
    %v458 = vpack.c.b16 %v414, %v410
    %v459 = vpack.c.b16 %v415, %v411
    %v460 = vpack.c.b16 %v420, %v416
    %v461 = vpack.c.b16 %v421, %v417
    %v462 = vpack.c.b16 %v422, %v418
    %v463 = vpack.c.b16 %v423, %v419
    %v464 = vpack.c.b16 %v428, %v424
    %v465 = vpack.c.b16 %v429, %v425
    %v466 = vpack.c.b16 %v430, %v426
    %v467 = vpack.c.b16 %v431, %v427
    %v468 = vpack.c.b16 %v436, %v432
    %v469 = vpack.c.b16 %v437, %v433
    %v470 = vpack.c.b16 %v438, %v434
    %v471 = vpack.c.b16 %v439, %v435
    %504 = vmatprep.subr.bf16.mxu0 %v441
    %505 = vmatpush1.bf16.msra.mxu0 %v440
    %506 = vmatprep.subr.bf16.mxu0 %v445
    %507 = vmatpush1.bf16.msra.mxu0 %v444
    %508 = vmatprep.subr.bf16.mxu0 %v449
    %509 = vmatpush1.bf16.msra.mxu0 %v448
    %510 = vmatprep.subr.bf16.mxu0 %v453
    %511 = vmatpush1.bf16.msra.mxu0 %v452
    %512 = vmatprep.subr.bf16.mxu0 %v457
    %513 = vmatpush1.bf16.msra.mxu0 %v456
    %514 = vmatprep.subr.bf16.mxu0 %v461
    %515 = vmatpush1.bf16.msra.mxu0 %v460
    %516 = vmatprep.subr.bf16.mxu0 %v465
    %517 = vmatpush1.bf16.msra.mxu0 %v464
    %518 = vmatprep.subr.bf16.mxu0 %v469
    %519 = vmatpush1.bf16.msra.mxu0 %v468
    %520 = vmatprep.subr.bf16.mxu0 0
    %521 = vmatpush1.bf16.msra.mxu0 0
    %522 = vmatprep.subr.bf16.mxu0 0
    %523 = vmatpush1.bf16.msra.mxu0 0
    %524 = vmatprep.subr.bf16.mxu0 0
    %525 = vmatpush1.bf16.msra.mxu0 0
    %526 = vmatprep.subr.bf16.mxu0 0
    %527 = vmatpush1.bf16.msra.mxu0 0
    %528 = vmatprep.subr.bf16.mxu0 0
    %529 = vmatpush1.bf16.msra.mxu0 0
    %530 = vmatprep.subr.bf16.mxu0 0
    %531 = vmatpush1.bf16.msra.mxu0 0
    %532 = vmatprep.subr.bf16.mxu0 0
    %533 = vmatpush1.bf16.msra.mxu0 0
    %534 = vmatprep.subr.bf16.mxu0 0
    %535 = vmatpush1.bf16.msra.mxu0 0
    %536 = vmatprep.mubr.bf16.mxu0 0
    %537 = vmatmul.mubr.bf16.gmra.mrb[0].mxu0 %v311
    %v538 = vpop.f32.mrb[0].mxu0
    %v539 = vadd.f32 0.0, %v538
    %v540 = vpop.f32.mrb[0].mxu0
    %v541 = vadd.f32 0.0, %v540
    %v542 = vpop.f32.mrb[0].mxu0
    %v543 = vpop.f32.mrb[0].mxu0
    %544 = vdwg.mxu0
    %545 = vmatprep.subr.bf16.mxu0 %v443
    %546 = vmatpush1.bf16.msra.mxu0 %v442
    %547 = vmatprep.subr.bf16.mxu0 %v447
    %548 = vmatpush1.bf16.msra.mxu0 %v446
    %549 = vmatprep.subr.bf16.mxu0 %v451
    %550 = vmatpush1.bf16.msra.mxu0 %v450
    %551 = vmatprep.subr.bf16.mxu0 %v455
    %552 = vmatpush1.bf16.msra.mxu0 %v454
    %553 = vmatprep.subr.bf16.mxu0 %v459
    %554 = vmatpush1.bf16.msra.mxu0 %v458
    %555 = vmatprep.subr.bf16.mxu0 %v463
    %556 = vmatpush1.bf16.msra.mxu0 %v462
    %557 = vmatprep.subr.bf16.mxu0 %v467
    %558 = vmatpush1.bf16.msra.mxu0 %v466
    %559 = vmatprep.subr.bf16.mxu0 %v471
    %560 = vmatpush1.bf16.msra.mxu0 %v470
    %561 = vmatprep.subr.bf16.mxu0 0
    %562 = vmatpush1.bf16.msra.mxu0 0
    %563 = vmatprep.subr.bf16.mxu0 0
    %564 = vmatpush1.bf16.msra.mxu0 0
    %565 = vmatprep.subr.bf16.mxu0 0
    %566 = vmatpush1.bf16.msra.mxu0 0
    %567 = vmatprep.subr.bf16.mxu0 0
    %568 = vmatpush1.bf16.msra.mxu0 0
    %569 = vmatprep.subr.bf16.mxu0 0
    %570 = vmatpush1.bf16.msra.mxu0 0
    %571 = vmatprep.subr.bf16.mxu0 0
    %572 = vmatpush1.bf16.msra.mxu0 0
    %573 = vmatprep.subr.bf16.mxu0 0
    %574 = vmatpush1.bf16.msra.mxu0 0
    %575 = vmatprep.subr.bf16.mxu0 0
    %576 = vmatpush1.bf16.msra.mxu0 0
    %577 = vmatprep.mubr.bf16.mxu0 0
    %578 = vmatmul.mubr.bf16.gmra.mrb[0].mxu0 %v311
    %v579 = vpop.f32.mrb[0].mxu0
    %v580 = vadd.f32 0.0, %v579
    %v581 = vpop.f32.mrb[0].mxu0
    %v582 = vadd.f32 0.0, %v581
    %v583 = vpop.f32.mrb[0].mxu0
    %v584 = vpop.f32.mrb[0].mxu0
    %585 = vdwg.mxu0
    %586 = vst [vmem:[#allocation10] sm:$0xff] %v539
    %587 = vst [vmem:[#allocation10 + $0x8] sm:$0xff] %v541
    %588 = vst [vmem:[#allocation10 + $0x10] sm:$0xff] %v580
    %589 = vst [vmem:[#allocation10 + $0x18] sm:$0xff] %v582
    // Predicated region
    $region34: #{tpu_custom_call.1} parent=1 // pred_check
      _
    $region35: #{tpu_custom_call.1} parent=1 // pred_check_branch
      %591 = sbr.rel (0) target = $region37
    $region36: #{tpu_custom_call.1} parent=1 // pred_region
      %s593 = ssub.s32 512, 512
      %594 = vsyncadd [#allocation4], %s593
      %s596 = sshll.u32 [#allocation10], 4
      %s597 = int_to_ptr.vmem [resolvable:$true] %s596
      %599 = dma.vmem_to_hbm [thread:$0]  %s597, 512, %s4, [#allocation4]
    $region37: #{tpu_custom_call.1} parent=1 // pred_fallthru
      _
    // Predicated region
    $region38: #{tpu_custom_call.1} parent=1 // pred_check
      _
    $region39: #{tpu_custom_call.1} parent=1 // pred_check_branch
      %601 = sbr.rel (0) target = $region41
    $region40: #{tpu_custom_call.1} parent=1 // pred_region
      %602 = dma.done [#allocation4], 512
    $region41: #{tpu_custom_call.1} parent=1 // pred_fallthru
      _
    %603 = vsyncpa [#allocation3], 1
    %604 = vsyncpa [#allocation6], 1
    %605 = vsyncpa [#allocation9], 1
    %606 = vsyncpa [#allocation4], 1

</llo_original>
